<compile_context>
chip_gen: v7x
topology: tpu7x:2x2x1
jax: 0.10.0
libtpu: 0.0.40
codegen_flags: <defaults>
</compile_context>

<pallas_src>
import math

import jax
import jax.numpy as jnp
from jax import lax
from jax.experimental import pallas as pl
from jax.experimental.pallas import tpu as pltpu


def _round_up(n: int, m: int) -> int:
    return ((n + m - 1) // m) * m


def _target_block_bytes() -> int:
    """Per-input-block byte budget, chosen per TPU generation."""
    try:
        kind = jax.devices()[0].device_kind.lower()
    except Exception:
        kind = ""
    if "v7" in kind:
        return 8 << 20   # ~2048 f32 rows @ 1024 lanes (needs raised vmem limit)
    if "v6" in kind:
        return 4 << 20   # ~1024 rows (fits 32 MiB default scoped VMEM)
    return 2 << 20       # v5e / v4 / unknown: ~512 rows (16 MiB default scoped)


def _pick_lanes(M: int):
    """Widest lane count in {1024,512,256,128} that divides M (no pad copy);
    otherwise fall back to 128 lanes with a < 128-element zero pad."""
    for lanes in (1024, 512, 256, 128):
        if M % lanes == 0:
            return lanes, 0
    lanes = 128
    return lanes, (-M) % lanes


def _make_kernel(tr: int, valid_rows: int, needs_mask: bool):
    def kernel(x_ref, t_ref, out_ref):
        x = x_ref[...].astype(jnp.float32)
        t = t_ref[...].astype(jnp.float32)

        # PyTorch BCELoss clamps each log term at -100.
        log_x = jnp.maximum(jnp.log(x), -100.0)
        log_1mx = jnp.maximum(jnp.log(1.0 - x), -100.0)

        # -(t*log_x + (1-t)*log_1mx) == -( t*(log_x - log_1mx) + log_1mx );
        # the negation and the 1/N mean scale are applied once in the wrapper.
        vals = t * (log_x - log_1mx) + log_1mx

        if needs_mask:
            # The last (partial) block reads out-of-bounds garbage rows; zero
            # them out.  `valid_rows` is a compile-time constant.
            row = pl.program_id(0) * tr + lax.broadcasted_iota(
                jnp.int32, vals.shape, 0)
            vals = jnp.where(row < valid_rows, vals, 0.0)

        # Sublane-only reduce -> lane-dense (1, lanes) partial (unmasked vst).
        out_ref[...] = jnp.sum(vals, axis=0, keepdims=True)

    return kernel


def bce_loss_total(
    input_scale: jax.Array,
    target_scale: jax.Array,
    *,
    block_bytes: int | None = None,
) -> jax.Array:
    """Sum over batch of per-batch-element mean BCE. Inputs: [B, ...] probabilities."""
    assert input_scale.shape == target_scale.shape
    shape = input_scale.shape
    B = shape[0]
    N = math.prod(shape[1:])   # per-batch-element count (same for every b)
    M = B * N                  # total element count

    # ---- Layout: lane-dense (rows, lanes) slab, no pad in the common case ----
    lanes, pad = _pick_lanes(M)
    if pad == 0:
        x2d = input_scale.reshape(-1, lanes)        # free (contiguous) reshape
        t2d = target_scale.reshape(-1, lanes)
    else:
        # Rare path: pad < 128 elements with (x=0, t=0), which contribute
        # exactly 0 loss (t*clamped_log(0) = 0, (1-t)*log(1-0) = 0).
        x2d = jnp.pad(input_scale.reshape(-1), (0, pad)).reshape(-1, lanes)
        t2d = jnp.pad(target_scale.reshape(-1), (0, pad)).reshape(-1, lanes)
    rows = x2d.shape[0]

    # ---- Row-tile selection (per-generation, megacore-aware) ----
    itemsize = jnp.dtype(input_scale.dtype).itemsize
    if block_bytes is None:
        block_bytes = _target_block_bytes()
    tr_budget = max(16, (block_bytes // (lanes * itemsize)) // 16 * 16)

    if rows > tr_budget:
        tr = tr_budget
    elif rows >= 32:
        # Guarantee >= 2 grid steps so the "parallel" axis can shard across
        # both TensorCores on v7x; keep the tile a multiple of 16 sublanes.
        tr = _round_up(pl.cdiv(rows, 2), 16)
    else:
        # Tiny input: a single full-extent block (exempt from the (8,128) rule).
        tr = rows

    num_blocks = pl.cdiv(rows, tr)
    needs_mask = (rows % tr) != 0

    # 2 inputs x 2 pipeline buffers + headroom; kept well under v7x's 64 MiB.
    working = 2 * 2 * tr * lanes * itemsize
    vmem_limit = int(min(max(working + (8 << 20), 16 << 20), 56 << 20))

    partials = pl.pallas_call(
        _make_kernel(tr, rows, needs_mask),
        out_shape=jax.ShapeDtypeStruct((num_blocks, lanes), jnp.float32),
        grid=(num_blocks,),
        in_specs=[
            pl.BlockSpec((tr, lanes), lambda i: (i, 0)),
            pl.BlockSpec((tr, lanes), lambda i: (i, 0)),
        ],
        out_specs=pl.BlockSpec((1, lanes), lambda i: (i, 0)),
        compiler_params=pltpu.CompilerParams(
            # Independent partial sums per block -> parallel (megacore shards
            # the row axis across TensorCores on v7x).
            dimension_semantics=("parallel",),
            vmem_limit_bytes=vmem_limit,
        ),
    )(x2d, t2d)

    # Final tiny collapse + negate + per-batch-element mean scale, done once.
    return -jnp.sum(partials) / jnp.float32(N)


def _reference(input_scale, target_scale):
    x = input_scale.astype(jnp.float32)
    t = target_scale.astype(jnp.float32)
    log_x = jnp.maximum(jnp.log(x), -100.0)
    log_1mx = jnp.maximum(jnp.log(1.0 - x), -100.0)
    loss = -(t * log_x + (1.0 - t) * log_1mx)
    B = x.shape[0]
    return jnp.sum(loss.reshape(B, -1).mean(axis=1))


if __name__ == "__main__":
    key = jax.random.PRNGKey(0)
    k1, k2 = jax.random.split(key)
    B, C, H, W = 2, 4, 16, 16
    # BCELoss expects probabilities in (0, 1): use sigmoid of random logits.
    x = jax.nn.sigmoid(jax.random.normal(k1, (B, C, H, W), dtype=jnp.float32))
    t = jax.random.uniform(k2, (B, C, H, W), dtype=jnp.float32)

    total = bce_loss_total(x, t)
    jax.block_until_ready(total)

    ref = _reference(x, t)
    assert jnp.allclose(total, ref, rtol=1e-5, atol=1e-5), (total, ref)
    print("KERNEL_OK")
</pallas_src>

<mosaic_0001>
module attributes {stable_mosaic.version = 11 : i64} {
  func.func @kernel(%arg0: i32, %arg1: memref<2x1024xf32, #tpu.memory_space<vmem>>, %arg2: memref<2x1024xf32, #tpu.memory_space<vmem>>, %arg3: memref<1x1024xf32, #tpu.memory_space<vmem>>) attributes {dimension_semantics = [#tpu.dimension_semantics<parallel>], iteration_bounds = array<i64: 1>, scalar_prefetch = 0 : i64, scratch_operands = 0 : i64, tpu.core_type = #tpu.core_type<tc>, window_params = [{transform_indices = @transform_0, window_bounds = array<i64: 2, 1024>}, {transform_indices = @transform_1, window_bounds = array<i64: 2, 1024>}, {transform_indices = @transform_2, window_bounds = array<i64: 1, 1024>}]} {
    %c0 = arith.constant 0 : index
    %c0_0 = arith.constant 0 : index
    %0 = vector.load %arg1[%c0, %c0_0] : memref<2x1024xf32, #tpu.memory_space<vmem>>, vector<2x1024xf32>
    %c0_1 = arith.constant 0 : index
    %c0_2 = arith.constant 0 : index
    %1 = vector.load %arg2[%c0_1, %c0_2] : memref<2x1024xf32, #tpu.memory_space<vmem>>, vector<2x1024xf32>
    %2 = math.log %0 : vector<2x1024xf32>
    %cst = arith.constant -1.000000e+02 : f32
    %3 = vector.broadcast %cst : f32 to vector<2x1024xf32>
    %4 = arith.maximumf %2, %3 : vector<2x1024xf32>
    %cst_3 = arith.constant 1.000000e+00 : f32
    %5 = vector.broadcast %cst_3 : f32 to vector<2x1024xf32>
    %6 = arith.subf %5, %0 : vector<2x1024xf32>
    %7 = math.log %6 : vector<2x1024xf32>
    %cst_4 = arith.constant -1.000000e+02 : f32
    %8 = vector.broadcast %cst_4 : f32 to vector<2x1024xf32>
    %9 = arith.maximumf %7, %8 : vector<2x1024xf32>
    %10 = arith.subf %4, %9 : vector<2x1024xf32>
    %11 = arith.mulf %1, %10 : vector<2x1024xf32>
    %12 = arith.addf %11, %9 : vector<2x1024xf32>
    %cst_5 = arith.constant dense<0.000000e+00> : vector<1024xf32>
    %13 = vector.multi_reduction <add>, %12, %cst_5 [0] : vector<2x1024xf32> to vector<1024xf32>
    %14 = vector.shape_cast %13 : vector<1024xf32> to vector<1x1024xf32>
    %c0_6 = arith.constant 0 : index
    %c0_7 = arith.constant 0 : index
    %15 = vector.load %arg3[%c0_6, %c0_7] : memref<1x1024xf32, #tpu.memory_space<vmem>>, vector<1x1024xf32>
    tpu.vector_store %arg3[%c0_6, %c0_7], %14 {strides = array<i32>} : memref<1x1024xf32, #tpu.memory_space<vmem>>, vector<1x1024xf32>,
    return
  }
  func.func @transform_0(%arg0: i32) -> (i32, i32) {
    %c0_i32 = arith.constant 0 : i32
    %c0_i32_0 = arith.constant 0 : i32
    return %arg0, %c0_i32 : i32, i32
  }
  func.func @transform_1(%arg0: i32) -> (i32, i32) {
    %c0_i32 = arith.constant 0 : i32
    %c0_i32_0 = arith.constant 0 : i32
    return %arg0, %c0_i32 : i32, i32
  }
  func.func @transform_2(%arg0: i32) -> (i32, i32) {
    %c0_i32 = arith.constant 0 : i32
    %c0_i32_0 = arith.constant 0 : i32
    return %arg0, %c0_i32 : i32, i32
  }
}

</mosaic_0001>

<llo_original>
// kernel: tpu_custom_call.1
$region0: #{tpu_custom_call.1}
  #allocation0 [shape = 'u32[]', space=smem, size = 0x4, offset = 0x4, fixed_abs, tag = 'smem constant byte address 0x4 - core index']
  #allocation1 [shape = 'u32[144,128]{1,0:T(1,128)}', space=vmem, size = 0x12000, scoped, tag = 'internal scratch']
  %s0 = inlined_call_operand.hbm [shape: f32[2,1024], index: 0, kind: input, shape index: {}]
  %s1 = inlined_call_operand.hbm [shape: f32[2,1024], index: 1, kind: input, shape index: {}]
  %s2 = inlined_call_operand.hbm [shape: f32[1,1024], index: 2, kind: output, shape index: {}]
  %s3 = sld [smem:[#allocation0]]
  $region26: #{tpu_custom_call.1} parent=0
    _
  %s5 = ssub.s32 1, %s3
  %s6 = scalar_select 0, %s5, %s3
  $region1: #{tpu_custom_call.1} parent=0
    #allocation2 [shape = 'u8[8192]{0}', space=vmem, size = 0x2000, scoped, tag = 'input window, operand 0, single buffered']
    #allocation3 [shape = 's32[1]{0}', space=sflag, size = 0x4, scoped, tag = 'scoped memory for tpu_custom_call.1']
    #allocation4 [shape = 's32[1]{0}', space=sflag, size = 0x4, scoped, tag = 'scoped memory for tpu_custom_call.1']
    #allocation5 [shape = 'u8[8192]{0}', space=vmem, size = 0x2000, scoped, tag = 'input window, operand 1, single buffered']
    #allocation6 [shape = 's32[1]{0}', space=sflag, size = 0x4, scoped, tag = 'scoped memory for tpu_custom_call.1']
    #allocation7 [shape = 'u8[4096]{0}', space=vmem, size = 0x1000, scoped, tag = 'output window, operand 0, single buffered']
    %7 = vsyncpa [#allocation3], 0
    %8 = vsyncpa [#allocation6], 0
    %9 = vsyncpa [#allocation4], 0
    // Predicated region
    $region2: #{tpu_custom_call.1} parent=1 // pred_check
      _
    $region3: #{tpu_custom_call.1} parent=1 // pred_check_branch
      %11 = sbr.rel (0) target = $region5
    $region4: #{tpu_custom_call.1} parent=1 // pred_region
      %s13 = ssub.s32 256, 256
      %14 = vsyncadd [#allocation3], %s13
      %s16 = sshll.u32 [#allocation2], 4
      %s17 = int_to_ptr.vmem [resolvable:$true] %s16
      %19 = dma.hbm_to_vmem [thread:$0]  %s0, 256, %s17, [#allocation3]
    $region5: #{tpu_custom_call.1} parent=1 // pred_fallthru
      _
    // Predicated region
    $region6: #{tpu_custom_call.1} parent=1 // pred_check
      _
    $region7: #{tpu_custom_call.1} parent=1 // pred_check_branch
      %21 = sbr.rel (0) target = $region9
    $region8: #{tpu_custom_call.1} parent=1 // pred_region
      %s23 = ssub.s32 256, 256
      %24 = vsyncadd [#allocation6], %s23
      %s26 = sshll.u32 [#allocation5], 4
      %s27 = int_to_ptr.vmem [resolvable:$true] %s26
      %29 = dma.hbm_to_vmem [thread:$0]  %s1, 256, %s27, [#allocation6]
    $region9: #{tpu_custom_call.1} parent=1 // pred_fallthru
      _
    // Predicated region
    $region10: #{tpu_custom_call.1} parent=1 // pred_check
      _
    $region11: #{tpu_custom_call.1} parent=1 // pred_check_branch
      %31 = sbr.rel (0) target = $region13
    $region12: #{tpu_custom_call.1} parent=1 // pred_region
      %32 = dma.done [#allocation3], 256
    $region13: #{tpu_custom_call.1} parent=1 // pred_fallthru
      _
    // Predicated region
    $region14: #{tpu_custom_call.1} parent=1 // pred_check
      _
    $region15: #{tpu_custom_call.1} parent=1 // pred_check_branch
      %34 = sbr.rel (0) target = $region17
    $region16: #{tpu_custom_call.1} parent=1 // pred_region
      %35 = dma.done [#allocation6], 256
    $region17: #{tpu_custom_call.1} parent=1 // pred_fallthru
      _
    %v36 = vld [vmem:[#allocation2] sm:$0xff]
    %v37 = vld [vmem:[#allocation2 + $0x8] sm:$0xff]
    %v38 = vld [vmem:[#allocation5] sm:$0xff]
    %v39 = vld [vmem:[#allocation5 + $0x8] sm:$0xff]
    %v40 = vlog2.pop %v36
    %v41 = vmul.f32 %v40, 0.6931472
    %v42 = vlog2.pop %v37
    %v43 = vmul.f32 %v42, 0.6931472
    %v44 = vmax.f32 %v41, -100.0
    %v45 = vmax.f32 %v43, -100.0
    %v46 = vsub.f32 1.0, %v36
    %v47 = vsub.f32 1.0, %v37
    %v48 = vlog2.pop %v46
    %v49 = vmul.f32 %v48, 0.6931472
    %v50 = vlog2.pop %v47
    %v51 = vmul.f32 %v50, 0.6931472
    %v52 = vmax.f32 %v49, -100.0
    %v53 = vmax.f32 %v51, -100.0
    %v54 = vsub.f32 %v44, %v52
    %v55 = vsub.f32 %v45, %v53
    %v56 = vmul.f32 %v38, %v54
    %v57 = vmul.f32 %v39, %v55
    %v58 = vadd.f32 %v56, %v52
    %v59 = vadd.f32 %v57, %v53
    %v62 = vcombine.high %v58, %v58
    %v64 = vunpack.c.l.s4 1983009808
    %v65 = vunpack.c.0.s8 %v64
    %v66 = vlaneseq
    %v67 = vshrl.u32 %v66, 7
    %v68 = vsub.s32 %v65, %v67
    %v69 = vrot.slane %v58, %v68
    %v71 = vunpack.c.l.s4 1983009808
    %v72 = vunpack.c.0.s8 %v71
    %v73 = vlaneseq
    %v74 = vshrl.u32 %v73, 7
    %v75 = vsub.s32 %v72, %v74
    %v76 = vrot.slane %v62, %v75
    %v77 = vcombine.high %v69, %v69
    %v78 = vcombine.high %v76, %v76
    %v79 = vcombine.high %v59, %v59
    %v81 = vunpack.c.l.s4 1983009808
    %v82 = vunpack.c.0.s8 %v81
    %v83 = vlaneseq
    %v84 = vshrl.u32 %v83, 7
    %v85 = vsub.s32 %v82, %v84
    %v86 = vrot.slane %v59, %v85
    %v88 = vunpack.c.l.s4 1983009808
    %v89 = vunpack.c.0.s8 %v88
    %v90 = vlaneseq
    %v91 = vshrl.u32 %v90, 7
    %v92 = vsub.s32 %v89, %v91
    %v93 = vrot.slane %v79, %v92
    %v94 = vcombine.high %v86, %v86
    %v95 = vcombine.high %v93, %v93
    %vm104 = vcmask 1041408
    %v105 = vsel %vm104, %v69, 0.0
    %v106 = vrot.slane %v105, 4
    %v107 = vadd.f32 %v105, %v106
    %v108 = vrot.slane %v107, 2
    %v109 = vadd.f32 %v107, %v108
    %v110 = vrot.slane %v109, 1
    %v111 = vadd.f32 %v109, %v110
    %v112 = vsel %vm104, %v77, 0.0
    %v113 = vrot.slane %v112, 4
    %v114 = vadd.f32 %v112, %v113
    %v115 = vrot.slane %v114, 2
    %v116 = vadd.f32 %v114, %v115
    %v117 = vrot.slane %v116, 1
    %v118 = vadd.f32 %v116, %v117
    %v119 = vsel %vm104, %v76, 0.0
    %v120 = vrot.slane %v119, 4
    %v121 = vadd.f32 %v119, %v120
    %v122 = vrot.slane %v121, 2
    %v123 = vadd.f32 %v121, %v122
    %v124 = vrot.slane %v123, 1
    %v125 = vadd.f32 %v123, %v124
    %v126 = vsel %vm104, %v78, 0.0
    %v127 = vrot.slane %v126, 4
    %v128 = vadd.f32 %v126, %v127
    %v129 = vrot.slane %v128, 2
    %v130 = vadd.f32 %v128, %v129
    %v131 = vrot.slane %v130, 1
    %v132 = vadd.f32 %v130, %v131
    %v133 = vsel %vm104, %v86, 0.0
    %v134 = vrot.slane %v133, 4
    %v135 = vadd.f32 %v133, %v134
    %v136 = vrot.slane %v135, 2
    %v137 = vadd.f32 %v135, %v136
    %v138 = vrot.slane %v137, 1
    %v139 = vadd.f32 %v137, %v138
    %v140 = vsel %vm104, %v94, 0.0
    %v141 = vrot.slane %v140, 4
    %v142 = vadd.f32 %v140, %v141
    %v143 = vrot.slane %v142, 2
    %v144 = vadd.f32 %v142, %v143
    %v145 = vrot.slane %v144, 1
    %v146 = vadd.f32 %v144, %v145
    %v147 = vsel %vm104, %v93, 0.0
    %v148 = vrot.slane %v147, 4
    %v149 = vadd.f32 %v147, %v148
    %v150 = vrot.slane %v149, 2
    %v151 = vadd.f32 %v149, %v150
    %v152 = vrot.slane %v151, 1
    %v153 = vadd.f32 %v151, %v152
    %v154 = vsel %vm104, %v95, 0.0
    %v155 = vrot.slane %v154, 4
    %v156 = vadd.f32 %v154, %v155
    %v157 = vrot.slane %v156, 2
    %v158 = vadd.f32 %v156, %v157
    %v159 = vrot.slane %v158, 1
    %v160 = vadd.f32 %v158, %v159
    %v169 = vcombine.low %v111, %v118
    %v170 = vcombine.low %v125, %v132
    %v171 = vcombine.low %v139, %v146
    %v172 = vcombine.low %v153, %v160
    %v174 = vunpack.c.l.s4 1966171168
    %v175 = vunpack.c.0.s8 %v174
    %v176 = vlaneseq
    %v177 = vshrl.u32 %v176, 7
    %v178 = vsub.s32 %v175, %v177
    %v179 = vrot.slane %v169, %v178
    %v181 = vunpack.c.l.s4 1966171168
    %v182 = vunpack.c.0.s8 %v181
    %v183 = vlaneseq
    %v184 = vshrl.u32 %v183, 7
    %v185 = vsub.s32 %v182, %v184
    %v186 = vrot.slane %v170, %v185
    %v188 = vunpack.c.l.s4 1966171168
    %v189 = vunpack.c.0.s8 %v188
    %v190 = vlaneseq
    %v191 = vshrl.u32 %v190, 7
    %v192 = vsub.s32 %v189, %v191
    %v193 = vrot.slane %v171, %v192
    %v195 = vunpack.c.l.s4 1966171168
    %v196 = vunpack.c.0.s8 %v195
    %v197 = vlaneseq
    %v198 = vshrl.u32 %v197, 7
    %v199 = vsub.s32 %v196, %v198
    %v200 = vrot.slane %v172, %v199
    %v201 = vcombine.low %v179, %v186
    %v202 = vcombine.low %v193, %v200
    %v204 = vunpack.c.l.s4 1966171168
    %v205 = vunpack.c.0.s8 %v204
    %v206 = vlaneseq
    %v207 = vshrl.u32 %v206, 7
    %v208 = vsub.s32 %v205, %v207
    %v209 = vrot.slane %v201, %v208
    %v211 = vunpack.c.l.s4 1966171168
    %v212 = vunpack.c.0.s8 %v211
    %v213 = vlaneseq
    %v214 = vshrl.u32 %v213, 7
    %v215 = vsub.s32 %v212, %v214
    %v216 = vrot.slane %v202, %v215
    %v217 = vcombine.low %v209, %v216
    %219 = vst [vmem:[#allocation7] sm:$0xff] %v217
    // Predicated region
    $region18: #{tpu_custom_call.1} parent=1 // pred_check
      _
    $region19: #{tpu_custom_call.1} parent=1 // pred_check_branch
      %221 = sbr.rel (0) target = $region21
    $region20: #{tpu_custom_call.1} parent=1 // pred_region
      %s223 = ssub.s32 128, 128
      %224 = vsyncadd [#allocation4], %s223
      %s226 = sshll.u32 [#allocation7], 4
      %s227 = int_to_ptr.vmem [resolvable:$true] %s226
      %229 = dma.vmem_to_hbm [thread:$0]  %s227, 128, %s2, [#allocation4]
    $region21: #{tpu_custom_call.1} parent=1 // pred_fallthru
      _
    // Predicated region
    $region22: #{tpu_custom_call.1} parent=1 // pred_check
      _
    $region23: #{tpu_custom_call.1} parent=1 // pred_check_branch
      %231 = sbr.rel (0) target = $region25
    $region24: #{tpu_custom_call.1} parent=1 // pred_region
      %232 = dma.done [#allocation4], 128
    $region25: #{tpu_custom_call.1} parent=1 // pred_fallthru
      _
    %233 = vsyncpa [#allocation3], 1
    %234 = vsyncpa [#allocation6], 1
    %235 = vsyncpa [#allocation4], 1

</llo_original>
